<compile_context>
chip_gen: v7x
topology: tpu7x:2x2x1
jax: 0.10.0
libtpu: 0.0.40
codegen_flags: <defaults>
</compile_context>

<pallas_src>
import jax
import jax.numpy as jnp
from jax.experimental import pallas as pl
from jax.experimental.pallas import tpu as pltpu


def _upper_model_kernel(x_ref, w1_ref, b1_ref, w2_ref, b2_ref, o_ref):
    # x_ref : [TB, F_in]  f32 (cast to MXU dtype in-kernel)
    # w1_ref: [F_in, H]   bf16 (pre-transposed W1^T, VMEM-resident)
    # b1_ref: [1, H]      f32
    # w2_ref: [H, O]      bf16 (pre-transposed W2^T, VMEM-resident)
    # b2_ref: [1, O]      f32
    # o_ref : [TB, O]     f32
    x = x_ref[...].astype(w1_ref.dtype)

    # linear1 (MXU, f32 accumulation) + bias (broadcast [1,H] row) + relu
    h = jnp.dot(x, w1_ref[...], preferred_element_type=jnp.float32) + b1_ref[...]
    h = jnp.maximum(h, 0.0)

    # linear2 (MXU, f32 accumulation) + bias
    z = jnp.dot(h.astype(w2_ref.dtype), w2_ref[...],
                preferred_element_type=jnp.float32) + b2_ref[...]

    # sigmoid(z) == 0.5 * tanh(0.5 * z) + 0.5  -> single EUP op, VALU does fma
    o_ref[...] = (0.5 * jnp.tanh(0.5 * z) + 0.5).astype(o_ref.dtype)


def _round_up(n, m):
    return ((n + m - 1) // m) * m


def _tpu_vmem_capacity_bytes():
    """Best-effort physical VMEM query; conservative fallback (v7x per-TC)."""
    try:
        return int(pltpu.get_tpu_info().vmem_capacity_bytes)
    except Exception:
        return 64 * 1024 * 1024


def prepare_params(w1, b1, w2, b2, *, mxu_dtype=jnp.bfloat16):
    """One-time parameter preprocessing (call at load time, NOT per forward).

    w1: [H, F_in], b1: [H], w2: [O, H], b2: [O]  (PyTorch nn.Linear layout)
    Returns MXU-native [in, out] weights (mxu_dtype) and [1, dim] f32 biases.
    """
    w1t = jnp.asarray(w1).T.astype(mxu_dtype)          # [F_in, H]
    w2t = jnp.asarray(w2).T.astype(mxu_dtype)          # [H, O]
    b1p = jnp.asarray(b1).astype(jnp.float32).reshape(1, -1)
    b2p = jnp.asarray(b2).astype(jnp.float32).reshape(1, -1)
    return w1t, b1p, w2t, b2p


def upper_model_forward(x, params, *, block_b=None):
    """UpperModel forward.

    x      : [B, F_in] f32
    params : output of prepare_params(w1, b1, w2, b2)
    returns [B, O] f32 == sigmoid(relu(x @ w1.T + b1) @ w2.T + b2)
    """
    w1t, b1p, w2t, b2p = params
    B, F_in = x.shape
    H = w1t.shape[1]
    O = w2t.shape[1]

    vmem_cap = _tpu_vmem_capacity_bytes()
    if block_b is None:
        # 128-MiB parts (v5e/v6e): big tiles amortize per-step overhead.
        # 64-MiB part (v7x): smaller tiles, two cores share VMEM.
        block_b = 1024 if vmem_cap >= 128 * 1024 * 1024 else 512

    # Batch tile: multiple of 8 sublanes; split so the grid has >= 2 steps when
    # possible (keeps both v7x TensorCores busy), capped at block_b.
    TB = min(block_b, max(8, _round_up(pl.cdiv(B, 2), 8)))
    grid = (pl.cdiv(B, TB),)  # ragged last tile handled by Pallas

    # VMEM limit: generous on 128-MiB parts, <= ~48 MiB on v7x.
    vmem_limit = min(vmem_cap * 3 // 4, 96 * 1024 * 1024)

    return pl.pallas_call(
        _upper_model_kernel,
        out_shape=jax.ShapeDtypeStruct((B, O), jnp.float32),
        grid_spec=pl.GridSpec(
            grid=grid,
            in_specs=[
                # streamed per batch tile (last dim == full F_in -> no padding)
                pl.BlockSpec((TB, F_in), lambda i: (i, 0)),
                # VMEM-resident weights / biases (constant block index)
                pl.BlockSpec((F_in, H), lambda i: (0, 0)),
                pl.BlockSpec((1, H), lambda i: (0, 0)),
                pl.BlockSpec((H, O), lambda i: (0, 0)),
                pl.BlockSpec((1, O), lambda i: (0, 0)),
            ],
            out_specs=pl.BlockSpec((TB, O), lambda i: (i, 0)),
        ),
        compiler_params=pltpu.CompilerParams(
            dimension_semantics=("parallel",),  # shard batch tiles across TCs
            vmem_limit_bytes=vmem_limit,
        ),
    )(x, w1t, b1p, w2t, b2p)


def init_params(key, in_dim, hidden, out_dim):
    """Deterministic init mimicking nn.Linear default (U[-1/sqrt(fan_in), ...])."""
    k1, k2, k3, k4 = jax.random.split(key, 4)
    lim1 = 1.0 / jnp.sqrt(in_dim)
    lim2 = 1.0 / jnp.sqrt(hidden)
    w1 = jax.random.uniform(k1, (hidden, in_dim), jnp.float32, -lim1, lim1)
    b1 = jax.random.uniform(k2, (hidden,), jnp.float32, -lim1, lim1)
    w2 = jax.random.uniform(k3, (out_dim, hidden), jnp.float32, -lim2, lim2)
    b2 = jax.random.uniform(k4, (out_dim,), jnp.float32, -lim2, lim2)
    return w1, b1, w2, b2


if __name__ == "__main__":
    key = jax.random.PRNGKey(0)
    kx, kp = jax.random.split(key)

    B, F_IN, HIDDEN, OUT = 8, 32, 64, 16
    x = jax.random.normal(kx, (B, F_IN), dtype=jnp.float32)
    w1, b1, w2, b2 = init_params(kp, F_IN, HIDDEN, OUT)

    # one-time layout work (hoisted out of the forward path)
    params = prepare_params(w1, b1, w2, b2)

    out = upper_model_forward(x, params)
    out = jax.block_until_ready(out)

    # pure-JAX f32 reference of the same math (bf16 MXU operands in the kernel
    # -> loosened tolerance vs the f32 reference)
    ref = jax.nn.sigmoid(jnp.maximum(x @ w1.T + b1, 0.0) @ w2.T + b2)
    assert out.shape == (B, OUT)
    assert jnp.allclose(out, ref, atol=2e-2, rtol=2e-2), (
        float(jnp.max(jnp.abs(out - ref)))
    )

    print("KERNEL_OK")
</pallas_src>

<mosaic_0001>
module attributes {stable_mosaic.version = 11 : i64} {
  func.func @_upper_model_kernel(%arg0: i32, %arg1: memref<8x32xf32, #tpu.memory_space<vmem>>, %arg2: memref<32x64xbf16, #tpu.memory_space<vmem>>, %arg3: memref<1x64xf32, #tpu.memory_space<vmem>>, %arg4: memref<64x16xbf16, #tpu.memory_space<vmem>>, %arg5: memref<1x16xf32, #tpu.memory_space<vmem>>, %arg6: memref<8x16xf32, #tpu.memory_space<vmem>>) attributes {dimension_semantics = [#tpu.dimension_semantics<parallel>], iteration_bounds = array<i64: 1>, scalar_prefetch = 0 : i64, scratch_operands = 0 : i64, tpu.core_type = #tpu.core_type<tc>, window_params = [{transform_indices = @transform_0, window_bounds = array<i64: 8, 32>}, {pipeline_mode = #tpu.pipeline_mode<synchronous>, transform_indices = @transform_1, window_bounds = array<i64: 32, 64>}, {pipeline_mode = #tpu.pipeline_mode<synchronous>, transform_indices = @transform_2, window_bounds = array<i64: 1, 64>}, {pipeline_mode = #tpu.pipeline_mode<synchronous>, transform_indices = @transform_3, window_bounds = array<i64: 64, 16>}, {pipeline_mode = #tpu.pipeline_mode<synchronous>, transform_indices = @transform_4, window_bounds = array<i64: 1, 16>}, {transform_indices = @transform_5, window_bounds = array<i64: 8, 16>}]} {
    %c0 = arith.constant 0 : index
    %c0_0 = arith.constant 0 : index
    %0 = vector.load %arg1[%c0, %c0_0] : memref<8x32xf32, #tpu.memory_space<vmem>>, vector<8x32xf32>
    %1 = arith.truncf %0 : vector<8x32xf32> to vector<8x32xbf16>
    %c0_1 = arith.constant 0 : index
    %c0_2 = arith.constant 0 : index
    %2 = vector.load %arg2[%c0_1, %c0_2] : memref<32x64xbf16, #tpu.memory_space<vmem>>, vector<32x64xbf16>
    %cst = arith.constant dense<0.000000e+00> : vector<8x64xf32>
    %3 = tpu.matmul %1, %2, %cst {dimension_numbers = #tpu.dot_dimension_numbers<[1], [0], [0], [1], [0, 0, 1, 1], [], []>} : vector<8x32xbf16>, vector<32x64xbf16>, vector<8x64xf32> -> vector<8x64xf32>
    %c0_3 = arith.constant 0 : index
    %c0_4 = arith.constant 0 : index
    %4 = vector.load %arg3[%c0_3, %c0_4] : memref<1x64xf32, #tpu.memory_space<vmem>>, vector<1x64xf32>
    %5 = vector.broadcast %4 : vector<1x64xf32> to vector<8x64xf32>
    %6 = arith.addf %3, %5 : vector<8x64xf32>
    %cst_5 = arith.constant 0.000000e+00 : f32
    %7 = vector.broadcast %cst_5 : f32 to vector<8x64xf32>
    %8 = arith.maximumf %6, %7 : vector<8x64xf32>
    %9 = arith.truncf %8 : vector<8x64xf32> to vector<8x64xbf16>
    %c0_6 = arith.constant 0 : index
    %c0_7 = arith.constant 0 : index
    %10 = vector.load %arg4[%c0_6, %c0_7] : memref<64x16xbf16, #tpu.memory_space<vmem>>, vector<64x16xbf16>
    %cst_8 = arith.constant dense<0.000000e+00> : vector<8x16xf32>
    %11 = tpu.matmul %9, %10, %cst_8 {dimension_numbers = #tpu.dot_dimension_numbers<[1], [0], [0], [1], [0, 0, 1, 1], [], []>} : vector<8x64xbf16>, vector<64x16xbf16>, vector<8x16xf32> -> vector<8x16xf32>
    %c0_9 = arith.constant 0 : index
    %c0_10 = arith.constant 0 : index
    %12 = vector.load %arg5[%c0_9, %c0_10] : memref<1x16xf32, #tpu.memory_space<vmem>>, vector<1x16xf32>
    %13 = vector.broadcast %12 : vector<1x16xf32> to vector<8x16xf32>
    %14 = arith.addf %11, %13 : vector<8x16xf32>
    %cst_11 = arith.constant 5.000000e-01 : f32
    %15 = vector.broadcast %cst_11 : f32 to vector<8x16xf32>
    %16 = arith.mulf %15, %14 : vector<8x16xf32>
    %17 = math.tanh %16 : vector<8x16xf32>
    %cst_12 = arith.constant 5.000000e-01 : f32
    %18 = vector.broadcast %cst_12 : f32 to vector<8x16xf32>
    %19 = arith.mulf %18, %17 : vector<8x16xf32>
    %cst_13 = arith.constant 5.000000e-01 : f32
    %20 = vector.broadcast %cst_13 : f32 to vector<8x16xf32>
    %21 = arith.addf %19, %20 : vector<8x16xf32>
    %c0_14 = arith.constant 0 : index
    %c0_15 = arith.constant 0 : index
    %22 = vector.load %arg6[%c0_14, %c0_15] : memref<8x16xf32, #tpu.memory_space<vmem>>, vector<8x16xf32>
    tpu.vector_store %arg6[%c0_14, %c0_15], %21 {strides = array<i32>} : memref<8x16xf32, #tpu.memory_space<vmem>>, vector<8x16xf32>,
    return
  }
  func.func @transform_0(%arg0: i32) -> (i32, i32) {
    %c0_i32 = arith.constant 0 : i32
    %c0_i32_0 = arith.constant 0 : i32
    return %arg0, %c0_i32 : i32, i32
  }
  func.func @transform_1(%arg0: i32) -> (i32, i32) {
    %c0_i32 = arith.constant 0 : i32
    %c0_i32_0 = arith.constant 0 : i32
    %c0_i32_1 = arith.constant 0 : i32
    return %c0_i32, %c0_i32_0 : i32, i32
  }
  func.func @transform_2(%arg0: i32) -> (i32, i32) {
    %c0_i32 = arith.constant 0 : i32
    %c0_i32_0 = arith.constant 0 : i32
    %c0_i32_1 = arith.constant 0 : i32
    return %c0_i32, %c0_i32_0 : i32, i32
  }
  func.func @transform_3(%arg0: i32) -> (i32, i32) {
    %c0_i32 = arith.constant 0 : i32
    %c0_i32_0 = arith.constant 0 : i32
    %c0_i32_1 = arith.constant 0 : i32
    return %c0_i32, %c0_i32_0 : i32, i32
  }
  func.func @transform_4(%arg0: i32) -> (i32, i32) {
    %c0_i32 = arith.constant 0 : i32
    %c0_i32_0 = arith.constant 0 : i32
    %c0_i32_1 = arith.constant 0 : i32
    return %c0_i32, %c0_i32_0 : i32, i32
  }
  func.func @transform_5(%arg0: i32) -> (i32, i32) {
    %c0_i32 = arith.constant 0 : i32
    %c0_i32_0 = arith.constant 0 : i32
    return %arg0, %c0_i32 : i32, i32
  }
}

</mosaic_0001>

<llo_original>
// kernel: tpu_custom_call.1
$region0: #{tpu_custom_call.1}
  #allocation0 [shape = 'u32[]', space=smem, size = 0x4, offset = 0x4, fixed_abs, tag = 'smem constant byte address 0x4 - core index']
  #allocation1 [shape = 'u32[144,128]{1,0:T(1,128)}', space=vmem, size = 0x12000, scoped, tag = 'internal scratch']
  %s0 = inlined_call_operand.vmem [shape: f32[8,32], index: 0, kind: input, shape index: {}]
  %s1 = inlined_call_operand.vmem [shape: bf16[32,64], index: 1, kind: input, shape index: {}]
  %s2 = inlined_call_operand.vmem [shape: f32[1,64], index: 2, kind: input, shape index: {}]
  %s3 = inlined_call_operand.vmem [shape: bf16[64,16], index: 3, kind: input, shape index: {}]
  %s4 = inlined_call_operand.vmem [shape: f32[1,16], index: 4, kind: input, shape index: {}]
  %s5 = inlined_call_operand.hbm [shape: f32[8,16], index: 5, kind: output, shape index: {}]
  %s6 = sld [smem:[#allocation0]]
  $region30: #{tpu_custom_call.1} parent=0
    _
  %s8 = ssub.s32 1, %s6
  %s9 = scalar_select 0, %s8, %s6
  $region1: #{tpu_custom_call.1} parent=0
    #allocation2 [shape = 'u8[4096]{0}', space=vmem, size = 0x1000, scoped, tag = 'output window, operand 0, single buffered']
    #allocation3 [shape = 's32[1]{0}', space=sflag, size = 0x4, scoped, tag = 'scoped memory for tpu_custom_call.1']
    %10 = vsyncpa [#allocation3], 0
    // Predicated region
    $region2: #{tpu_custom_call.1} parent=1 // pred_check
      _
    $region3: #{tpu_custom_call.1} parent=1 // pred_check_branch
      %12 = sbr.rel (0) target = $region5
    $region4: #{tpu_custom_call.1} parent=1 // pred_region
      _
    $region5: #{tpu_custom_call.1} parent=1 // pred_fallthru
      _
    // Predicated region
    $region6: #{tpu_custom_call.1} parent=1 // pred_check
      _
    $region7: #{tpu_custom_call.1} parent=1 // pred_check_branch
      %14 = sbr.rel (0) target = $region9
    $region8: #{tpu_custom_call.1} parent=1 // pred_region
      _
    $region9: #{tpu_custom_call.1} parent=1 // pred_fallthru
      _
    // Predicated region
    $region10: #{tpu_custom_call.1} parent=1 // pred_check
      _
    $region11: #{tpu_custom_call.1} parent=1 // pred_check_branch
      %16 = sbr.rel (0) target = $region13
    $region12: #{tpu_custom_call.1} parent=1 // pred_region
      _
    $region13: #{tpu_custom_call.1} parent=1 // pred_fallthru
      _
    // Predicated region
    $region14: #{tpu_custom_call.1} parent=1 // pred_check
      _
    $region15: #{tpu_custom_call.1} parent=1 // pred_check_branch
      %18 = sbr.rel (0) target = $region17
    $region16: #{tpu_custom_call.1} parent=1 // pred_region
      _
    $region17: #{tpu_custom_call.1} parent=1 // pred_fallthru
      _
    // Predicated region
    $region18: #{tpu_custom_call.1} parent=1 // pred_check
      _
    $region19: #{tpu_custom_call.1} parent=1 // pred_check_branch
      %20 = sbr.rel (0) target = $region21
    $region20: #{tpu_custom_call.1} parent=1 // pred_region
      _
    $region21: #{tpu_custom_call.1} parent=1 // pred_fallthru
      _
    %v22 = vld [vmem:[%s0] sm:$0xff]
    %v23 = vpack.c.bf16 %v22, %v22
    %v24 = vld [vmem:[%s1] sm:$0xf]
    %v25 = vld [vmem:[%s1 + $0x4] sm:$0xf]
    %v26 = vld [vmem:[%s1 + $0x8] sm:$0xf]
    %v27 = vld [vmem:[%s1 + $0xc] sm:$0xf]
    %v28 = vld [vmem:[%s2] sm:$0x1]
    %v30 = vlaneseq
    %v31 = vshrl.u32 %v30, 7
    %v32 = vsub.s32 0, %v31
    %v33 = vrot.slane %v28, %v32
    %v39 = vunpack.c.l.b16 %v24
    %v40 = vunpack.c.l.b16 %v25
    %v41 = vunpack.c.l.b16 %v26
    %v42 = vunpack.c.l.b16 %v27
    %v43 = vpack.c.b16 %v40, %v39
    %v44 = vpack.c.b16 %v42, %v41
    %vm47 = vcmask 261120
    %v49 = vsel %vm47, %v23, 0
    %51 = vmatprep.subr.bf16.mxu0 0
    %52 = vmatpush1.bf16.msra.mxu0 %v43
    %53 = vmatprep.subr.bf16.mxu0 0
    %54 = vmatpush1.bf16.msra.mxu0 %v44
    %55 = vmatprep.subr.bf16.mxu0 0
    %56 = vmatpush1.bf16.msra.mxu0 0
    %57 = vmatprep.subr.bf16.mxu0 0
    %58 = vmatpush1.bf16.msra.mxu0 0
    %59 = vmatprep.subr.bf16.mxu0 0
    %60 = vmatpush1.bf16.msra.mxu0 0
    %61 = vmatprep.subr.bf16.mxu0 0
    %62 = vmatpush1.bf16.msra.mxu0 0
    %63 = vmatprep.subr.bf16.mxu0 0
    %64 = vmatpush1.bf16.msra.mxu0 0
    %65 = vmatprep.subr.bf16.mxu0 0
    %66 = vmatpush1.bf16.msra.mxu0 0
    %67 = vmatprep.subr.bf16.mxu0 0
    %68 = vmatpush1.bf16.msra.mxu0 0
    %69 = vmatprep.subr.bf16.mxu0 0
    %70 = vmatpush1.bf16.msra.mxu0 0
    %71 = vmatprep.subr.bf16.mxu0 0
    %72 = vmatpush1.bf16.msra.mxu0 0
    %73 = vmatprep.subr.bf16.mxu0 0
    %74 = vmatpush1.bf16.msra.mxu0 0
    %75 = vmatprep.subr.bf16.mxu0 0
    %76 = vmatpush1.bf16.msra.mxu0 0
    %77 = vmatprep.subr.bf16.mxu0 0
    %78 = vmatpush1.bf16.msra.mxu0 0
    %79 = vmatprep.subr.bf16.mxu0 0
    %80 = vmatpush1.bf16.msra.mxu0 0
    %81 = vmatprep.subr.bf16.mxu0 0
    %82 = vmatpush1.bf16.msra.mxu0 0
    %83 = vmatprep.mubr.bf16.mxu0 0
    %84 = vmatmul.mubr.bf16.gmra.mrb[0].mxu0 %v49
    %v85 = vpop.f32.mrb[0].mxu0
    %v86 = vadd.f32 %v33, %v85
    %v87 = vpop.f32.mrb[0].mxu0
    %v88 = vpop.f32.mrb[0].mxu0
    %v89 = vpop.f32.mrb[0].mxu0
    %90 = vdwg.mxu0
    %v91 = vmax.f32 %v86, 0.0
    %v92 = vpack.c.bf16 %v91, %v91
    %v93 = vld [vmem:[%s3] sm:$0xf]
    %v94 = vld [vmem:[%s3 + $0x4] sm:$0xf]
    %v95 = vld [vmem:[%s3 + $0x8] sm:$0xf]
    %v96 = vld [vmem:[%s3 + $0xc] sm:$0xf]
    %v97 = vld [vmem:[%s3 + $0x10] sm:$0xf]
    %v98 = vld [vmem:[%s3 + $0x14] sm:$0xf]
    %v99 = vld [vmem:[%s3 + $0x18] sm:$0xf]
    %v100 = vld [vmem:[%s3 + $0x1c] sm:$0xf]
    %v101 = vld [vmem:[%s4] sm:$0x1]
    %v103 = vlaneseq
    %v104 = vshrl.u32 %v103, 7
    %v105 = vsub.s32 0, %v104
    %v106 = vrot.slane %v101, %v105
    %v116 = vunpack.c.l.b16 %v93
    %v117 = vunpack.c.l.b16 %v94
    %v118 = vunpack.c.l.b16 %v95
    %v119 = vunpack.c.l.b16 %v96
    %v120 = vunpack.c.l.b16 %v97
    %v121 = vunpack.c.l.b16 %v98
    %v122 = vunpack.c.l.b16 %v99
    %v123 = vunpack.c.l.b16 %v100
    %v124 = vpack.c.b16 %v117, %v116
    %v125 = vpack.c.b16 %v119, %v118
    %v126 = vpack.c.b16 %v121, %v120
    %v127 = vpack.c.b16 %v123, %v122
    %vm132 = vcmask 523264
    %v134 = vsel %vm132, %v92, 0
    %136 = vmatprep.subr.bf16.mxu0 0
    %137 = vmatpush1.bf16.msra.mxu0 %v124
    %138 = vmatprep.subr.bf16.mxu0 0
    %139 = vmatpush1.bf16.msra.mxu0 %v125
    %140 = vmatprep.subr.bf16.mxu0 0
    %141 = vmatpush1.bf16.msra.mxu0 %v126
    %142 = vmatprep.subr.bf16.mxu0 0
    %143 = vmatpush1.bf16.msra.mxu0 %v127
    %144 = vmatprep.subr.bf16.mxu0 0
    %145 = vmatpush1.bf16.msra.mxu0 0
    %146 = vmatprep.subr.bf16.mxu0 0
    %147 = vmatpush1.bf16.msra.mxu0 0
    %148 = vmatprep.subr.bf16.mxu0 0
    %149 = vmatpush1.bf16.msra.mxu0 0
    %150 = vmatprep.subr.bf16.mxu0 0
    %151 = vmatpush1.bf16.msra.mxu0 0
    %152 = vmatprep.subr.bf16.mxu0 0
    %153 = vmatpush1.bf16.msra.mxu0 0
    %154 = vmatprep.subr.bf16.mxu0 0
    %155 = vmatpush1.bf16.msra.mxu0 0
    %156 = vmatprep.subr.bf16.mxu0 0
    %157 = vmatpush1.bf16.msra.mxu0 0
    %158 = vmatprep.subr.bf16.mxu0 0
    %159 = vmatpush1.bf16.msra.mxu0 0
    %160 = vmatprep.subr.bf16.mxu0 0
    %161 = vmatpush1.bf16.msra.mxu0 0
    %162 = vmatprep.subr.bf16.mxu0 0
    %163 = vmatpush1.bf16.msra.mxu0 0
    %164 = vmatprep.subr.bf16.mxu0 0
    %165 = vmatpush1.bf16.msra.mxu0 0
    %166 = vmatprep.subr.bf16.mxu0 0
    %167 = vmatpush1.bf16.msra.mxu0 0
    %168 = vmatprep.mubr.bf16.mxu0 0
    %169 = vmatmul.mubr.bf16.gmra.mrb[0].mxu0 %v134
    %v170 = vpop.f32.mrb[0].mxu0
    %v171 = vadd.f32 %v106, %v170
    %v172 = vpop.f32.mrb[0].mxu0
    %v173 = vpop.f32.mrb[0].mxu0
    %v174 = vpop.f32.mrb[0].mxu0
    %175 = vdwg.mxu0
    %v176 = vmul.f32 %v171, 0.5
    %v177 = vtanh.pop %v176
    %v178 = vmul.f32 %v177, 0.5
    %v179 = vadd.f32 %v178, 0.5
    %vm180 = vcmask 130048
    %181 = vst.msk [vmem:[#allocation2] sm:$0xff] %vm180, %v179
    // Predicated region
    $region22: #{tpu_custom_call.1} parent=1 // pred_check
      _
    $region23: #{tpu_custom_call.1} parent=1 // pred_check_branch
      %183 = sbr.rel (0) target = $region25
    $region24: #{tpu_custom_call.1} parent=1 // pred_region
      %s185 = ssub.s32 128, 128
      %186 = vsyncadd [#allocation3], %s185
      %s188 = sshll.u32 [#allocation2], 4
      %s189 = int_to_ptr.vmem [resolvable:$true] %s188
      %191 = dma.vmem_to_hbm [thread:$0]  %s189, 128, %s5, [#allocation3]
    $region25: #{tpu_custom_call.1} parent=1 // pred_fallthru
      _
    // Predicated region
    $region26: #{tpu_custom_call.1} parent=1 // pred_check
      _
    $region27: #{tpu_custom_call.1} parent=1 // pred_check_branch
      %193 = sbr.rel (0) target = $region29
    $region28: #{tpu_custom_call.1} parent=1 // pred_region
      %194 = dma.done [#allocation3], 128
    $region29: #{tpu_custom_call.1} parent=1 // pred_fallthru
      _
    %195 = vsyncpa [#allocation3], 1

</llo_original>
